<compile_context>
chip_gen: v5e
topology: v5e:2x2
jax: 0.10.0
libtpu: 0.0.40
codegen_flags: <defaults>
</compile_context>

<pallas_src>
import functools

import jax
import jax.numpy as jnp
from jax.experimental import pallas as pl
from jax.experimental.pallas import tpu as pltpu


def _round_up(x, m):
    return ((int(x) + m - 1) // m) * m


def _vmem_capacity_bytes():
    """Per-core VMEM capacity; fall back to the smallest in the fleet (v7x)."""
    try:
        return int(pltpu.get_tpu_info().vmem_capacity_bytes)
    except Exception:
        return 64 * 1024 * 1024


def _entropy_tile_kernel(x_ref, out_ref, *, eps, n_rows, tm):
    """One grid step: partial sum over rows of sum_c p*log(p+eps) for this tile."""
    i = pl.program_id(0)

    # Restructured to minimize live (tm, C) f32 temporaries.
    x = x_ref[...].astype(jnp.float32)                       # (tm, C)
    x = x - jnp.max(x, axis=-1, keepdims=True)               # stable shift (reuse x)
    p = jnp.exp(x)                                           # EUP
    # approx=False: exact normalization for 1e-5 parity with PyTorch.
    p = p * pl.reciprocal(jnp.sum(p, axis=-1, keepdims=True), approx=False)
    # Keep eps inside the log to match p * log(p + eps) exactly.
    ent = jnp.sum(p * jnp.log(p + jnp.float32(eps)),
                  axis=-1, keepdims=True)                    # (tm, 1)

    # Ragged last tile: rows past the true batch hold undefined data (possibly
    # Inf/NaN).  Select-mask them (no multiply, so NaN cannot propagate).
    row = jax.lax.broadcasted_iota(jnp.int32, ent.shape, 0)  # (tm, 1)
    ent = jnp.where(row + i * tm < n_rows, ent, jnp.float32(0.0))

    tile_sum = jnp.sum(ent, axis=0, keepdims=True)           # (1, 1)
    out_ref[...] = tile_sum.reshape(1, 1, 1)


def entropy_loss(outputs, eps, *, tm=None):
    """Pallas implementation of EntropyLoss.forward for 2-D (batch, classes)."""
    N, C = outputs.shape
    itemsize = jnp.dtype(outputs.dtype).itemsize
    sub = 8 * max(1, 4 // itemsize)        # sublane granule: 8 for f32, 16 for bf16
    c_pad = _round_up(C, 128)              # lanes actually occupied in VMEM

    vmem_cap = _vmem_capacity_bytes()
    # Peak VMEM bytes per row: double-buffered input tile (input dtype) plus a
    # headroom of ~4 full-tile f32 temporaries for the kernel body.
    per_row_bytes = c_pad * (2 * itemsize + 4 * 4)

    if tm is None:
        tm = int(0.55 * vmem_cap) // per_row_bytes
        # Keep >= ~4 grid steps so both v7x TensorCores stay busy.
        tm = min(tm, pl.cdiv(N, 4))
    tm = max(sub, (int(tm) // sub) * sub)
    tm = min(tm, _round_up(N, sub))        # never larger than the (rounded) batch

    num_tiles = pl.cdiv(N, tm)

    # Derive the scoped VMEM limit from the actual tile footprint (with margin),
    # clamped under the physical capacity (important on v7x's 64 MiB).
    vmem_need = tm * per_row_bytes + (2 << 20)
    vmem_limit = int(min(max(vmem_need, 32 << 20), 0.85 * vmem_cap))

    kernel = functools.partial(_entropy_tile_kernel,
                               eps=float(eps), n_rows=N, tm=tm)

    partials = pl.pallas_call(
        kernel,
        out_shape=jax.ShapeDtypeStruct((num_tiles, 1, 1), jnp.float32),
        grid_spec=pltpu.PrefetchScalarGridSpec(
            num_scalar_prefetch=0,
            grid=(num_tiles,),
            in_specs=[pl.BlockSpec((tm, C), lambda i: (i, 0))],
            out_specs=pl.BlockSpec((1, 1, 1), lambda i: (i, 0, 0)),
        ),
        compiler_params=pltpu.CompilerParams(
            # Disjoint output blocks per step -> shardable across TensorCores.
            dimension_semantics=("parallel",),
            vmem_limit_bytes=vmem_limit,
        ),
    )(outputs)

    # mean over the true batch (padded/masked rows contributed exactly 0).
    return jnp.sum(partials) / jnp.float32(N)


def entropy_loss_ref(outputs, eps):
    p = jax.nn.softmax(outputs.astype(jnp.float32), axis=1)
    return jnp.mean(jnp.sum(p * jnp.log(p + eps), axis=1))


if __name__ == "__main__":
    eps = 1e-6

    # Small demo shape consistent with the module: (batch, classes) logits.
    key = jax.random.PRNGKey(0)
    x1 = jax.random.normal(key, (16, 32), dtype=jnp.float32)
    out1 = jax.block_until_ready(entropy_loss(x1, eps))
    ref1 = entropy_loss_ref(x1, eps)
    assert jnp.allclose(out1, ref1, atol=1e-5, rtol=1e-5), (out1, ref1)

    # Exercise the ragged multi-tile path (batch not a multiple of tm): the
    # last tile's undefined rows must be masked inside the kernel.
    _, k2 = jax.random.split(key)
    x2 = jax.random.normal(k2, (200, 32), dtype=jnp.float32)
    out2 = jax.block_until_ready(entropy_loss(x2, eps, tm=64))
    ref2 = entropy_loss_ref(x2, eps)
    assert jnp.allclose(out2, ref2, atol=1e-5, rtol=1e-5), (out2, ref2)

    print("KERNEL_OK")
</pallas_src>

<mosaic_0001>
module attributes {stable_mosaic.version = 11 : i64} {
  func.func @_entropy_tile_kernel(%arg0: i32, %arg1: memref<8x32xf32, #tpu.memory_space<vmem>>, %arg2: memref<1x1x1xf32, #tpu.memory_space<vmem>>) attributes {dimension_semantics = [#tpu.dimension_semantics<parallel>], iteration_bounds = array<i64: 2>, scalar_prefetch = 0 : i64, scratch_operands = 0 : i64, tpu.core_type = #tpu.core_type<tc>, window_params = [{transform_indices = @transform_0, window_bounds = array<i64: 8, 32>}, {transform_indices = @transform_1, window_bounds = array<i64: 1, 1, 1>}]} {
    %c0 = arith.constant 0 : index
    %c0_0 = arith.constant 0 : index
    %0 = vector.load %arg1[%c0, %c0_0] : memref<8x32xf32, #tpu.memory_space<vmem>>, vector<8x32xf32>
    %cst = arith.constant dense<0xFF800000> : vector<8xf32>
    %1 = vector.multi_reduction <maximumf>, %0, %cst [1] : vector<8x32xf32> to vector<8xf32>
    %2 = vector.shape_cast %1 : vector<8xf32> to vector<8x1xf32>
    %3 = vector.broadcast %2 : vector<8x1xf32> to vector<8x32xf32>
    %4 = arith.subf %0, %3 : vector<8x32xf32>
    %5 = math.exp %4 : vector<8x32xf32>
    %cst_1 = arith.constant dense<0.000000e+00> : vector<8xf32>
    %6 = vector.multi_reduction <add>, %5, %cst_1 [1] : vector<8x32xf32> to vector<8xf32>
    %7 = vector.shape_cast %6 : vector<8xf32> to vector<8x1xf32>
    %8 = tpu.reciprocal %7 : vector<8x1xf32> -> vector<8x1xf32>
    %9 = vector.broadcast %8 : vector<8x1xf32> to vector<8x32xf32>
    %10 = arith.mulf %5, %9 : vector<8x32xf32>
    %cst_2 = arith.constant 9.99999997E-7 : f32
    %11 = vector.broadcast %cst_2 : f32 to vector<8x32xf32>
    %12 = arith.addf %10, %11 : vector<8x32xf32>
    %13 = math.log %12 : vector<8x32xf32>
    %14 = arith.mulf %10, %13 : vector<8x32xf32>
    %cst_3 = arith.constant dense<0.000000e+00> : vector<8xf32>
    %15 = vector.multi_reduction <add>, %14, %cst_3 [1] : vector<8x32xf32> to vector<8xf32>
    %16 = vector.shape_cast %15 : vector<8xf32> to vector<8x1xf32>
    %17 = tpu.iota {dimensions = array<i32: 0>} : vector<8x1xi32>
    %c8_i32 = arith.constant 8 : i32
    %18 = arith.muli %arg0, %c8_i32 : i32
    %19 = vector.broadcast %18 : i32 to vector<8x1xi32>
    %20 = arith.addi %17, %19 : vector<8x1xi32>
    %c16_i32 = arith.constant 16 : i32
    %21 = vector.broadcast %c16_i32 : i32 to vector<8x1xi32>
    %22 = arith.cmpi slt, %20, %21 : vector<8x1xi32>
    %cst_4 = arith.constant 0.000000e+00 : f32
    %23 = vector.broadcast %cst_4 : f32 to vector<8x1xf32>
    %24 = arith.select %22, %16, %23 : vector<8x1xi1>, vector<8x1xf32>
    %cst_5 = arith.constant dense<0.000000e+00> : vector<1xf32>
    %25 = vector.multi_reduction <add>, %24, %cst_5 [0] : vector<8x1xf32> to vector<1xf32>
    %26 = vector.shape_cast %25 : vector<1xf32> to vector<1x1xf32>
    %27 = vector.shape_cast %26 : vector<1x1xf32> to vector<1x1x1xf32>
    %c0_6 = arith.constant 0 : index
    %c0_7 = arith.constant 0 : index
    %c0_8 = arith.constant 0 : index
    %28 = vector.load %arg2[%c0_6, %c0_7, %c0_8] : memref<1x1x1xf32, #tpu.memory_space<vmem>>, vector<1x1x1xf32>
    tpu.vector_store %arg2[%c0_6, %c0_7, %c0_8], %27 {strides = array<i32>} : memref<1x1x1xf32, #tpu.memory_space<vmem>>, vector<1x1x1xf32>,
    return
  }
  func.func @transform_0(%arg0: i32) -> (i32, i32) {
    %c0_i32 = arith.constant 0 : i32
    %c0_i32_0 = arith.constant 0 : i32
    return %arg0, %c0_i32 : i32, i32
  }
  func.func @transform_1(%arg0: i32) -> (i32, i32, i32) {
    %c0_i32 = arith.constant 0 : i32
    %c0_i32_0 = arith.constant 0 : i32
    %c0_i32_1 = arith.constant 0 : i32
    return %arg0, %c0_i32, %c0_i32_0 : i32, i32, i32
  }
}

</mosaic_0001>

<llo_original>
// kernel: tpu_custom_call.1
$region0: #{tpu_custom_call.1}
  #allocation0 [shape = 'u32[]', space=smem, size = 0x4, offset = 0x4, fixed_abs, tag = 'smem constant byte address 0x4 - core index']
  #allocation1 [shape = 'u32[72,128]{1,0:T(1,128)}', space=vmem, size = 0x9000, scoped, tag = 'internal scratch']
  %s0 = inlined_call_operand.hbm [shape: f32[16,32], index: 0, kind: input, shape index: {}]
  %s1 = inlined_call_operand.vmem [shape: f32[2,1,1], index: 1, kind: output, shape index: {}]
  %s2 = sld [smem:[#allocation0]]
  $region41: #{tpu_custom_call.1} parent=0
    _
  %s4 = ssub.s32 1, %s2
  %s5 = scalar_select 0, %s4, %s2
  $region1: #{tpu_custom_call.1} parent=0
    #allocation2 [shape = 'u8[8192]{0}', space=vmem, size = 0x2000, scoped, tag = 'input window, operand 0']
    #allocation3 [shape = 's32[2]{0}', space=sflag, size = 0x8, scoped, tag = 'scoped memory for tpu_custom_call.1']
    %6 = vsyncpa [#allocation3], 0
    %s7 = scalar_lea.sflag [#allocation3], 1
    %8 = vsyncpa %s7, 0
    loop: start=0, step=1, limit=4
    $region2: #{tpu_custom_call.1} parent=1 // loop_pre_header
      _
    $region3: #{tpu_custom_call.1} parent=1 // loop_header
      %s10 = sphi 0, %s14
      %p11 = scmp.ge.s32.totalorder %s10, 4
      %s20 = sphi 0, %s22
      %s23 = sphi 0, %s20
      %s24 = sphi 0, %s23
      %s40 = sphi 0, %s24
      %s46 = sphi 0, %s48
      %s49 = sphi 0, %s46
      %s50 = sphi 0, %s49
      %s66 = sphi 0, %s50
    $region4: #{tpu_custom_call.1} parent=1 // loop_header_branch
      %13 = sbr.rel (%p11) target = $region8
    $region5: #{tpu_custom_call.1} parent=1 // loop_body
      %s15 = ssub.s32 %s10, 1
      %s16 = ssub.s32 %s10, 2
      %s17 = sadd.s32 %s10, 1
      %s18 = ssub.s32 %s10, %s17
      %p19 = scmp.eq.s32.totalorder %s18, 0
      %s21 = sadd.s32 %s20, 1
      %s22 = scalar_select %p19, %s20, %s21
      %p25 = pneg %p19
      %p26 = scmp.eq.s32.totalorder %s10, 1
      %p27 = por %p25, %p26
      %p28 = scmp.ne.s32.totalorder %s20, %s23
      %p29 = scmp.eq.s32.totalorder %s10, 0
      %p30 = por %p28, %p29
      %p31 = scmp.ne.s32.totalorder %s20, %s23
      %p32 = scmp.eq.s32.totalorder %s15, 1
      %p33 = por %p31, %p32
      %p34 = scmp.ne.s32.totalorder %s23, %s24
      %p35 = scmp.eq.s32.totalorder %s15, 0
      %p36 = por %p34, %p35
      %p37 = scmp.ne.s32.totalorder %s23, %s24
      %p38 = scmp.eq.s32.totalorder %s16, 1
      %p39 = por %p37, %p38
      %p41 = scmp.ne.s32.totalorder %s24, %s40
      %p42 = scmp.eq.s32.totalorder %s16, 0
      %p43 = por %p41, %p42
      %s44 = ssub.s32 %s10, %s17
      %p45 = scmp.eq.s32.totalorder %s44, 0
      %s47 = sadd.s32 %s46, 1
      %s48 = scalar_select %p45, %s46, %s47
      %p51 = pneg %p45
      %p52 = scmp.eq.s32.totalorder %s10, 1
      %p53 = por %p51, %p52
      %p54 = scmp.ne.s32.totalorder %s46, %s49
      %p55 = scmp.eq.s32.totalorder %s10, 0
      %p56 = por %p54, %p55
      %p57 = scmp.ne.s32.totalorder %s46, %s49
      %p58 = scmp.eq.s32.totalorder %s15, 1
      %p59 = por %p57, %p58
      %p60 = scmp.ne.s32.totalorder %s49, %s50
      %p61 = scmp.eq.s32.totalorder %s15, 0
      %p62 = por %p60, %p61
      %p63 = scmp.ne.s32.totalorder %s49, %s50
      %p64 = scmp.eq.s32.totalorder %s16, 1
      %p65 = por %p63, %p64
      %p67 = scmp.ne.s32.totalorder %s50, %s66
      %p68 = scmp.eq.s32.totalorder %s16, 0
      %p69 = por %p67, %p68
      %p70 = scmp.le.s32.totalorder 1, %s10
      %p71 = scmp.lt.s32.totalorder %s10, 3
      %p72 = pnand %p70, %p71
      %p73 = pneg %p72
      // Predicated region
      $region9: #{tpu_custom_call.1} parent=5 // pred_check
        _
      $region10: #{tpu_custom_call.1} parent=5 // pred_check_branch
        %75 = sbr.rel (%p72) target = $region12
      $region11: #{tpu_custom_call.1} parent=5 // pred_region
        %s76 = ssub.s32 %s10, 1
      $region12: #{tpu_custom_call.1} parent=5 // pred_fallthru
        _
      %p77 = scmp.lt.s32.totalorder %s10, 2
      // Predicated region
      $region13: #{tpu_custom_call.1} parent=5 // pred_check
        %p78 = pneg %p77
      $region14: #{tpu_custom_call.1} parent=5 // pred_check_branch
        %80 = sbr.rel (%p78) target = $region16
      $region15: #{tpu_custom_call.1} parent=5 // pred_region
        // Predicated region
        $region17: #{tpu_custom_call.1} parent=15 // pred_check
          %p81 = pneg %p30
        $region18: #{tpu_custom_call.1} parent=15 // pred_check_branch
          %83 = sbr.rel (%p81) target = $region20
        $region19: #{tpu_custom_call.1} parent=15 // pred_region
          %s84 = sand.u32 %s20, 1
          %s85 = scalar_lea.sflag [#allocation3], %s84
          %s86 = sand.u32 %s20, 1
          %s87 = smul.addr %s86, 8
          %s88 = scalar_lea.vmem [#allocation2], %s87
          %90 = vsyncadd %s85, 0
          %s91 = smul.addr %s10, 8
          %s92 = scalar_lea.hbm %s0, %s91
          %s94 = sshll.u32 %s92, 4
          %s95 = int_to_ptr.hbm [resolvable:$true] %s94
          %s96 = sshll.u32 %s88, 4
          %s97 = int_to_ptr.vmem [resolvable:$true] %s96
          %99 = dma.hbm_to_vmem [thread:$0]  %s95, 128, %s97, %s85
        $region20: #{tpu_custom_call.1} parent=15 // pred_fallthru
          _
      $region16: #{tpu_custom_call.1} parent=5 // pred_fallthru
        _
      %p100 = scmp.le.s32.totalorder 1, %s10
      %p101 = scmp.lt.s32.totalorder %s10, 3
      %p102 = pnand %p100, %p101
      %p103 = pneg %p102
      // Predicated region
      $region21: #{tpu_custom_call.1} parent=5 // pred_check
        _
      $region22: #{tpu_custom_call.1} parent=5 // pred_check_branch
        %105 = sbr.rel (%p102) target = $region24
      $region23: #{tpu_custom_call.1} parent=5 // pred_region
        %s106 = ssub.s32 %s10, 1
        %s107 = sand.u32 %s23, 1
        %s108 = scalar_lea.sflag [#allocation3], %s107
        %s109 = sand.u32 %s23, 1
        %s110 = smul.addr %s109, 8
        %s111 = scalar_lea.vmem [#allocation2], %s110
        // Predicated region
        $region25: #{tpu_custom_call.1} parent=23 // pred_check
          %p112 = pneg %p36
        $region26: #{tpu_custom_call.1} parent=23 // pred_check_branch
          %114 = sbr.rel (%p112) target = $region28
        $region27: #{tpu_custom_call.1} parent=23 // pred_region
          %116 = dma.done %s108, 128
        $region28: #{tpu_custom_call.1} parent=23 // pred_fallthru
          _
        %s117 = sand.u32 %s23, 1
        %s118 = scalar_lea.sflag [#allocation3], %s117
        %s119 = sand.u32 %s23, 1
        %s120 = smul.addr %s119, 8
        %s121 = scalar_lea.vmem [#allocation2], %s120
        %p122 = pneg %p36
        %p123 = pneg %p33
        %p124 = pneg %p62
        %p125 = pneg %p59
        %p126 = scmp.lt.s32.totalorder %s15, 1
        %s127 = scalar_select %p126, %s15, 1
        %s128 = scalar_lea.vmem %s1, %s127
        %p129 = scmp.lt.s32.totalorder %s15, 1
        %s130 = scalar_select %p129, %s15, 1
        %s131 = scalar_lea.vmem %s1, %s130
        %v132 = vld [vmem:[%s111] sm:$0xff]
        %vm133 = vcmask 261120
        %v134 = vsel %vm133, %v132, -inf
        %135 = vmax.xlane.f32.xlu0 %v134
        %v136 = vpop.xlane.xlu0 %135
        %v137 = vsub.f32 %v132, %v136
        %v138 = vmul.f32 %v137, 1.442695
        %v139 = vpow.pop %v138
        %v140 = vsel %vm133, %v139, 0.0
        %141 = vadd.xlane.f32.xlu0 %v140
        %v142 = vpop.xlane.xlu0 %141
        %v143 = vrcp.pop %v142
        %v144 = vmul.f32 %v142, %v143
        %v145 = vsub.f32 1.0, %v144
        %v146 = vmul.f32 %v143, %v145
        %v147 = vadd.f32 %v143, %v146
        %vm148 = vweird.f32 %v142
        %vm149 = vweird.f32 %v143
        %vm150 = vmor %vm148, %vm149
        %v151 = vsel %vm150, %v143, %v147
        %v152 = vand.u32 2147483647, %v142
        %vm153 = vcmp.eq.f32.partialorder %v152, 8.507059e+37
        %v154 = vand.u32 %v142, 2147483648
        %v155 = vor.u32 1.1754944e-38, %v154
        %v156 = vsel %vm153, %v155, %v151
        %v157 = vmul.f32 %v139, %v156
        %v158 = vadd.f32 %v157, 1e-06
        %v159 = vlog2.pop %v158
        %v160 = vmul.f32 %v159, 0.6931472
        %v161 = vmul.f32 %v157, %v160
        %v162 = vsel %vm133, %v161, 0.0
        %163 = vadd.xlane.f32.xlu0 %v162
        %v164 = vpop.xlane.xlu0 %163
        %v165 = vlaneseq
        %v166 = vshrl.u32 %v165, 7
        %s167 = smul.u32 %s15, 8
        %v168 = vstv %s167
        %v169 = vadd.s32 %v166, %v168
        %vm170 = vcmp.lt.s32.totalorder %v169, 16
        %v171 = vsel %vm170, %v164, 0.0
        %v172 = vrot.slane %v171, 4
        %v173 = vadd.f32 %v171, %v172
        %v174 = vrot.slane %v173, 2
        %v175 = vadd.f32 %v173, %v174
        %v176 = vrot.slane %v175, 1
        %v177 = vadd.f32 %v175, %v176
        %vm178 = vcmask 0
        %179 = vst.msk [vmem:[%s131] sm:$0x1] %vm178, %v177
        %p180 = scmp.lt.s32.totalorder %s15, 1
        %s181 = scalar_select %p180, %s15, 1
        %s182 = scalar_lea.vmem %s1, %s181
        // Predicated region
        $region29: #{tpu_custom_call.1} parent=23 // pred_check
          %p183 = pneg %p59
        $region30: #{tpu_custom_call.1} parent=23 // pred_check_branch
          %185 = sbr.rel (%p183) target = $region32
        $region31: #{tpu_custom_call.1} parent=23 // pred_region
          _
        $region32: #{tpu_custom_call.1} parent=23 // pred_fallthru
          _
      $region24: #{tpu_custom_call.1} parent=5 // pred_fallthru
        _
      %p186 = scmp.le.s32.totalorder 2, %s10
      // Predicated region
      $region33: #{tpu_custom_call.1} parent=5 // pred_check
        %p187 = pneg %p186
      $region34: #{tpu_custom_call.1} parent=5 // pred_check_branch
        %189 = sbr.rel (%p187) target = $region36
      $region35: #{tpu_custom_call.1} parent=5 // pred_region
        %s190 = ssub.s32 %s10, 2
        // Predicated region
        $region37: #{tpu_custom_call.1} parent=35 // pred_check
          %p191 = pneg %p65
        $region38: #{tpu_custom_call.1} parent=35 // pred_check_branch
          %193 = sbr.rel (%p191) target = $region40
        $region39: #{tpu_custom_call.1} parent=35 // pred_region
          %p194 = scmp.lt.s32.totalorder %s16, 1
          %s195 = scalar_select %p194, %s16, 1
          %s196 = scalar_lea.vmem %s1, %s195
        $region40: #{tpu_custom_call.1} parent=35 // pred_fallthru
          _
      $region36: #{tpu_custom_call.1} parent=5 // pred_fallthru
        _
    $region6: #{tpu_custom_call.1} parent=1 // loop_footer
      %s14 = sadd.s32 1, %s10
    $region7: #{tpu_custom_call.1} parent=1 // loop_footer_branch
      %9 = sbr.rel target = $region3
    $region8: #{tpu_custom_call.1} parent=1 // loop_exit
      _
    %197 = vsyncpa [#allocation3], 1
    %s198 = scalar_lea.sflag [#allocation3], 1
    %199 = vsyncpa %s198, 1

</llo_original>
